<compile_context>
chip_gen: v5e
topology: v5e:2x2
jax: 0.10.0
libtpu: 0.0.40
codegen_flags: <defaults>
</compile_context>

<pallas_src>
import jax
import jax.numpy as jnp
from jax.experimental import pallas as pl
from jax.experimental.pallas import tpu as pltpu

LANES = 128
SUBLANES = 8
TILE_ROWS = 2048  # (2048, 128) f32 block = 1 MiB per input buffer.


def _partial_reduce(x2d, y2d, n_valid):
    """x2d, y2d: (R, 128) arrays (any real dtype), R % 8 == 0.

    Returns (sum_partials, max_partials), each (grid, 8, 128) float32, where
    only the first `n_valid` flattened elements contribute:
      sum_partials -> sum((x - y)^2) over valid elements (after jnp.sum)
      max_partials -> max(y) over valid elements (after jnp.max)
    """
    rows = x2d.shape[0]
    tile_rows = min(TILE_ROWS, rows)            # both are multiples of 8
    grid_steps = pl.cdiv(rows, tile_rows)
    covered = grid_steps * tile_rows * LANES    # elements touched by the grid
    needs_mask = covered != n_valid             # static Python decision

    def kernel(x_ref, y_ref, psum_ref, pmax_ref):
        x = x_ref[...].astype(jnp.float32)
        y = y_ref[...].astype(jnp.float32)
        diff = x - y
        dsq = diff * diff
        y_for_max = y
        if needs_mask:
            # Mask both the wrapper's tail zero-pad and the unspecified rows of
            # a partial last block, by global flat element index (static n).
            i = pl.program_id(0)
            row = jax.lax.broadcasted_iota(jnp.int32, (tile_rows, LANES), 0)
            lane = jax.lax.broadcasted_iota(jnp.int32, (tile_rows, LANES), 1)
            flat = (row + i * tile_rows) * LANES + lane
            valid = flat < n_valid
            dsq = jnp.where(valid, dsq, 0.0)
            y_for_max = jnp.where(valid, y, -jnp.inf)
        # Leading-axis (non-minor) reduce: pure VPU adds/maxes, no XLU tree
        # reduce and no serial SMEM scalar chain across grid steps.
        psum_ref[...] = dsq.reshape(tile_rows // SUBLANES, SUBLANES, LANES).sum(axis=0)
        pmax_ref[...] = y_for_max.reshape(tile_rows // SUBLANES, SUBLANES, LANES).max(axis=0)

    return pl.pallas_call(
        kernel,
        out_shape=(
            jax.ShapeDtypeStruct((grid_steps, SUBLANES, LANES), jnp.float32),
            jax.ShapeDtypeStruct((grid_steps, SUBLANES, LANES), jnp.float32),
        ),
        grid=(grid_steps,),
        in_specs=[
            pl.BlockSpec((tile_rows, LANES), lambda i: (i, 0)),
            pl.BlockSpec((tile_rows, LANES), lambda i: (i, 0)),
        ],
        out_specs=(
            pl.BlockSpec((None, SUBLANES, LANES), lambda i: (i, 0, 0)),
            pl.BlockSpec((None, SUBLANES, LANES), lambda i: (i, 0, 0)),
        ),
        compiler_params=pltpu.CompilerParams(
            # Each step writes its own partial block (no carried state), so the
            # reduction axis is safely "parallel" -> shards across TCs on v7x.
            dimension_semantics=("parallel",),
        ),
    )(x2d, y2d)


def psnr_loss(img1, img2):
    """PSNR = 20 * log10(max(img2) / sqrt(mean((img1 - img2)^2))).

    Matches the PyTorch module: returns +inf when mse == 0.
    Inputs may be any real dtype; the reduction accumulates in float32.
    """
    n_valid = img1.size
    chunk = SUBLANES * LANES  # 1024: keep R a multiple of 8 (vreg-aligned rows)
    pad = (-n_valid) % chunk

    x = img1.reshape(-1)
    y = img2.reshape(-1)
    if pad:
        # Tiny tail pad (< 1024 elements) with zeros; padded elements are
        # masked out inside the kernel so the fill value is irrelevant.
        x = jnp.pad(x, (0, pad))
        y = jnp.pad(y, (0, pad))

    x2d = x.reshape(-1, LANES)
    y2d = y.reshape(-1, LANES)

    psum, pmax = _partial_reduce(x2d, y2d, n_valid)

    # Scalar epilogue on the (grid, 8, 128) partials — tiny, plain JAX.
    sum_sq = jnp.sum(psum)
    y_max = jnp.max(pmax)
    mse = sum_sq / jnp.float32(n_valid)
    psnr = 20.0 * jnp.log10(y_max / jnp.sqrt(mse))
    return jnp.where(mse == 0.0, jnp.float32(jnp.inf), psnr)


def _psnr_ref(img1, img2):
    a = img1.astype(jnp.float32)
    b = img2.astype(jnp.float32)
    mse = jnp.mean((a - b) ** 2)
    return jnp.where(
        mse == 0.0,
        jnp.float32(jnp.inf),
        20.0 * jnp.log10(b.max() / jnp.sqrt(mse)),
    )


if __name__ == "__main__":
    key = jax.random.PRNGKey(0)
    k1, k2, k3, k4 = jax.random.split(key, 4)

    psnr = jax.jit(psnr_loss)

    # NCHW, small shapes (batch=2, channels=4, spatial=16) — lane-aligned path.
    img1 = jax.random.uniform(k1, (2, 4, 16, 16), dtype=jnp.float32)
    img2 = jnp.clip(img1 + 0.05 * jax.random.normal(k2, (2, 4, 16, 16)), 0.0, 1.0)
    out = jax.block_until_ready(psnr(img1, img2))
    ref = _psnr_ref(img1, img2)
    assert jnp.allclose(out, ref, rtol=1e-5, atol=1e-5), (out, ref)

    # Ragged element count -> exercises the tail-pad + in-kernel masking path.
    a = jax.random.uniform(k3, (2, 3, 15, 17), dtype=jnp.float32)
    b = jnp.clip(a + 0.03 * jax.random.normal(k4, (2, 3, 15, 17)), 0.0, 1.0)
    out2 = jax.block_until_ready(psnr(a, b))
    ref2 = _psnr_ref(a, b)
    assert jnp.allclose(out2, ref2, rtol=1e-5, atol=1e-5), (out2, ref2)

    # Identical-image branch -> inf (mirrors the PyTorch float('inf') path).
    out_inf = jax.block_until_ready(psnr(img2, img2))
    assert jnp.isinf(out_inf)

    print("KERNEL_OK")
</pallas_src>

<mosaic_0001>
module attributes {stable_mosaic.version = 11 : i64} {
  func.func @kernel(%arg0: i32, %arg1: memref<16x128xf32, #tpu.memory_space<vmem>>, %arg2: memref<16x128xf32, #tpu.memory_space<vmem>>, %arg3: memref<1x8x128xf32, #tpu.memory_space<vmem>>, %arg4: memref<1x8x128xf32, #tpu.memory_space<vmem>>) attributes {dimension_semantics = [#tpu.dimension_semantics<parallel>], iteration_bounds = array<i64: 1>, scalar_prefetch = 0 : i64, scratch_operands = 0 : i64, tpu.core_type = #tpu.core_type<tc>, window_params = [{transform_indices = @transform_0, window_bounds = array<i64: 16, 128>}, {transform_indices = @transform_1, window_bounds = array<i64: 16, 128>}, {transform_indices = @transform_2, window_bounds = array<i64: 1, 8, 128>}, {transform_indices = @transform_3, window_bounds = array<i64: 1, 8, 128>}]} {
    %c0 = arith.constant 0 : index
    %c0_0 = arith.constant 0 : index
    %0 = vector.load %arg1[%c0, %c0_0] : memref<16x128xf32, #tpu.memory_space<vmem>>, vector<16x128xf32>
    %c0_1 = arith.constant 0 : index
    %c0_2 = arith.constant 0 : index
    %1 = vector.load %arg2[%c0_1, %c0_2] : memref<16x128xf32, #tpu.memory_space<vmem>>, vector<16x128xf32>
    %2 = arith.subf %0, %1 : vector<16x128xf32>
    %3 = arith.mulf %2, %2 : vector<16x128xf32>
    %4 = vector.shape_cast %3 : vector<16x128xf32> to vector<2x8x128xf32>
    %cst = arith.constant dense<0.000000e+00> : vector<8x128xf32>
    %5 = vector.multi_reduction <add>, %4, %cst [0] : vector<2x8x128xf32> to vector<8x128xf32>
    %c0_3 = arith.constant 0 : index
    %c0_4 = arith.constant 0 : index
    %c0_5 = arith.constant 0 : index
    %6 = vector.load %arg3[%c0_3, %c0_4, %c0_5] : memref<1x8x128xf32, #tpu.memory_space<vmem>>, vector<1x8x128xf32>
    %7 = vector.shape_cast %6 : vector<1x8x128xf32> to vector<8x128xf32>
    %8 = vector.shape_cast %5 : vector<8x128xf32> to vector<1x8x128xf32>
    tpu.vector_store %arg3[%c0_3, %c0_4, %c0_5], %8 {strides = array<i32>} : memref<1x8x128xf32, #tpu.memory_space<vmem>>, vector<1x8x128xf32>,
    %9 = vector.shape_cast %1 : vector<16x128xf32> to vector<2x8x128xf32>
    %cst_6 = arith.constant dense<0xFF800000> : vector<8x128xf32>
    %10 = vector.multi_reduction <maximumf>, %9, %cst_6 [0] : vector<2x8x128xf32> to vector<8x128xf32>
    %c0_7 = arith.constant 0 : index
    %c0_8 = arith.constant 0 : index
    %c0_9 = arith.constant 0 : index
    %11 = vector.load %arg4[%c0_7, %c0_8, %c0_9] : memref<1x8x128xf32, #tpu.memory_space<vmem>>, vector<1x8x128xf32>
    %12 = vector.shape_cast %11 : vector<1x8x128xf32> to vector<8x128xf32>
    %13 = vector.shape_cast %10 : vector<8x128xf32> to vector<1x8x128xf32>
    tpu.vector_store %arg4[%c0_7, %c0_8, %c0_9], %13 {strides = array<i32>} : memref<1x8x128xf32, #tpu.memory_space<vmem>>, vector<1x8x128xf32>,
    return
  }
  func.func @transform_0(%arg0: i32) -> (i32, i32) {
    %c0_i32 = arith.constant 0 : i32
    %c0_i32_0 = arith.constant 0 : i32
    return %arg0, %c0_i32 : i32, i32
  }
  func.func @transform_1(%arg0: i32) -> (i32, i32) {
    %c0_i32 = arith.constant 0 : i32
    %c0_i32_0 = arith.constant 0 : i32
    return %arg0, %c0_i32 : i32, i32
  }
  func.func @transform_2(%arg0: i32) -> (i32, i32, i32) {
    %c0_i32 = arith.constant 0 : i32
    %c0_i32_0 = arith.constant 0 : i32
    %c0_i32_1 = arith.constant 0 : i32
    return %arg0, %c0_i32, %c0_i32_0 : i32, i32, i32
  }
  func.func @transform_3(%arg0: i32) -> (i32, i32, i32) {
    %c0_i32 = arith.constant 0 : i32
    %c0_i32_0 = arith.constant 0 : i32
    %c0_i32_1 = arith.constant 0 : i32
    return %arg0, %c0_i32, %c0_i32_0 : i32, i32, i32
  }
}

</mosaic_0001>

<llo_original>
// kernel: psnr_loss.1
$region0: #{psnr_loss.1}
  #allocation0 [shape = 'u32[]', space=smem, size = 0x4, offset = 0x4, fixed_abs, tag = 'smem constant byte address 0x4 - core index']
  #allocation1 [shape = 'u32[72,128]{1,0:T(1,128)}', space=vmem, size = 0x9000, scoped, tag = 'internal scratch']
  %s0 = inlined_call_operand.vmem [shape: f32[16,128], index: 0, kind: input, shape index: {}]
  %s1 = inlined_call_operand.vmem [shape: f32[16,128], index: 1, kind: input, shape index: {}]
  %s2 = inlined_call_operand.vmem [shape: f32[1,8,128], index: 2, kind: output, shape index: {0}]
  %s3 = inlined_call_operand.vmem [shape: f32[1,8,128], index: 3, kind: output, shape index: {1}]
  %4 = xla_tuple %s2, %s3
  %s5 = sld [smem:[#allocation0]]
  $region26: #{psnr_loss.1} parent=0
    _
  %s7 = ssub.s32 1, %s5
  %s8 = scalar_select 0, %s7, %s5
  // Predicated region
  $region2: #{psnr_loss.1} parent=0 // pred_check
    _
  $region3: #{psnr_loss.1} parent=0 // pred_check_branch
    %10 = sbr.rel (0) target = $region5
  $region4: #{psnr_loss.1} parent=0 // pred_region
    _
  $region5: #{psnr_loss.1} parent=0 // pred_fallthru
    _
  // Predicated region
  $region6: #{psnr_loss.1} parent=0 // pred_check
    _
  $region7: #{psnr_loss.1} parent=0 // pred_check_branch
    %12 = sbr.rel (0) target = $region9
  $region8: #{psnr_loss.1} parent=0 // pred_region
    _
  $region9: #{psnr_loss.1} parent=0 // pred_fallthru
    _
  %v13 = vld [vmem:[%s0] sm:$0xff]
  %v14 = vld [vmem:[%s0 + $0x8] sm:$0xff]
  %v15 = vld [vmem:[%s1] sm:$0xff]
  %v16 = vld [vmem:[%s1 + $0x8] sm:$0xff]
  %v17 = vsub.f32 %v13, %v15
  %v18 = vsub.f32 %v14, %v16
  %v19 = vmul.f32 %v17, %v17
  %v20 = vmul.f32 %v18, %v18
  %v21 = vadd.f32 %v19, %v20
  %22 = vst [vmem:[%s2] sm:$0xff] %v21
  %v23 = vmax.f32 %v15, %v16
  %24 = vst [vmem:[%s3] sm:$0xff] %v23
  // Predicated region
  $region10: #{psnr_loss.1} parent=0 // pred_check
    _
  $region11: #{psnr_loss.1} parent=0 // pred_check_branch
    %26 = sbr.rel (0) target = $region13
  $region12: #{psnr_loss.1} parent=0 // pred_region
    _
  $region13: #{psnr_loss.1} parent=0 // pred_fallthru
    _
  // Predicated region
  $region14: #{psnr_loss.1} parent=0 // pred_check
    _
  $region15: #{psnr_loss.1} parent=0 // pred_check_branch
    %28 = sbr.rel (0) target = $region17
  $region16: #{psnr_loss.1} parent=0 // pred_region
    _
  $region17: #{psnr_loss.1} parent=0 // pred_fallthru
    _
  // Predicated region
  $region18: #{psnr_loss.1} parent=0 // pred_check
    _
  $region19: #{psnr_loss.1} parent=0 // pred_check_branch
    %30 = sbr.rel (0) target = $region21
  $region20: #{psnr_loss.1} parent=0 // pred_region
    _
  $region21: #{psnr_loss.1} parent=0 // pred_fallthru
    _
  // Predicated region
  $region22: #{psnr_loss.1} parent=0 // pred_check
    _
  $region23: #{psnr_loss.1} parent=0 // pred_check_branch
    %32 = sbr.rel (0) target = $region25
  $region24: #{psnr_loss.1} parent=0 // pred_region
    _
  $region25: #{psnr_loss.1} parent=0 // pred_fallthru
    _

</llo_original>
